<compile_context>
chip_gen: v6e
topology: v6e:2x2x1
jax: 0.10.0
libtpu: 0.0.40
codegen_flags: <defaults>
</compile_context>

<pallas_src>
import functools
import math

import jax
import jax.numpy as jnp
from jax.experimental import pallas as pl
from jax.experimental.pallas import tpu as pltpu

LN_EPS = 1e-5                      # nn.LayerNorm default
_VMEM_LIMIT = 48 * 1024 * 1024     # > 16/32 MiB defaults, < v7x 64 MiB physical


def _gelu(x):
    # tanh-approximation GELU (f32)
    return 0.5 * x * (1.0 + jnp.tanh(0.7978845608028654 * (x + 0.044715 * x * x * x)))


def _layernorm(x, gamma, beta):
    mu = jnp.mean(x, axis=-1, keepdims=True)
    var = jnp.mean((x - mu) ** 2, axis=-1, keepdims=True)
    return (x - mu) * jax.lax.rsqrt(var + LN_EPS) * gamma + beta


# ----------------------------------------------------------------------------
# Kernel 1: per-(batch, head) attention.  grid = (B, H), both parallel.
# Weights arrive head-major ((H, D, dh)) so the BlockSpec — not in-kernel
# slicing — selects the head's columns.  Output is head-major (B, H, S, dh).
# ----------------------------------------------------------------------------
def attention_kernel(scale,
                     x_ref, wq_ref, bq_ref, wk_ref, bk_ref, wv_ref, bv_ref,
                     ctx_ref):
    x = x_ref[0]                                                    # (S, D) bf16

    # Full-D contractions on the MXU (bf16 operands, f32 accumulation).
    qh = jnp.dot(x, wq_ref[0], preferred_element_type=jnp.float32) + bq_ref[0]
    kh = jnp.dot(x, wk_ref[0], preferred_element_type=jnp.float32) + bk_ref[0]
    vh = jnp.dot(x, wv_ref[0], preferred_element_type=jnp.float32) + bv_ref[0]

    q_b = qh.astype(jnp.bfloat16)
    k_b = kh.astype(jnp.bfloat16)
    v_b = vh.astype(jnp.bfloat16)

    s = jnp.dot(q_b, k_b.T, preferred_element_type=jnp.float32) * scale   # (S, S) f32

    # Softmax in f32; divide via EUP approx reciprocal (free vs. VPU divide).
    m = jnp.max(s, axis=-1, keepdims=True)
    e = jnp.exp(s - m)
    l = jnp.sum(e, axis=-1, keepdims=True)
    p = e * pl.reciprocal(l, approx=True)
    # attention dropout: identity (eval mode)

    ctx = jnp.dot(p.astype(jnp.bfloat16), v_b,
                  preferred_element_type=jnp.float32)                     # (S, dh)
    ctx_ref[0, 0] = ctx.astype(ctx_ref.dtype)


def attention(x, wq_h, bq_h, wk_h, bk_h, wv_h, bv_h, num_heads):
    B, S, D = x.shape
    H = num_heads
    dh = D // H
    scale = 1.0 / math.sqrt(dh)

    x_spec = pl.BlockSpec((1, S, D), lambda b, h: (b, 0, 0))
    w_spec = pl.BlockSpec((1, D, dh), lambda b, h: (h, 0, 0))
    b_spec = pl.BlockSpec((1, 1, dh), lambda b, h: (h, 0, 0))

    ctx = pl.pallas_call(
        functools.partial(attention_kernel, scale),
        out_shape=jax.ShapeDtypeStruct((B, H, S, dh), jnp.bfloat16),
        grid=(B, H),
        in_specs=[x_spec, w_spec, b_spec, w_spec, b_spec, w_spec, b_spec],
        out_specs=pl.BlockSpec((1, 1, S, dh), lambda b, h: (b, h, 0, 0)),
        compiler_params=pltpu.CompilerParams(
            dimension_semantics=("parallel", "parallel"),
            vmem_limit_bytes=_VMEM_LIMIT),
    )(x, wq_h, bq_h, wk_h, bk_h, wv_h, bv_h)

    # Head concat (B,H,S,dh) -> (B,S,D): cheap XLA layout glue outside kernels.
    return ctx.transpose(0, 2, 1, 3).reshape(B, S, D)


# ----------------------------------------------------------------------------
# Kernel 2: output projection + add&LN + FFN + add&LN (+ fused mean-pool
# epilogue for the classifier).  grid = (B,), parallel.
# ----------------------------------------------------------------------------
def mlp_kernel(ctx_ref, x_ref, wo_ref, bo_ref, g1_ref, be1_ref,
               w1_ref, b1_ref, w2_ref, b2_ref, g2_ref, be2_ref,
               y_ref, pooled_ref):
    # ONE (S,D)x(D,D) output projection for all heads.
    attn = jnp.dot(ctx_ref[0], wo_ref[...],
                   preferred_element_type=jnp.float32) + bo_ref[...]
    x = x_ref[0].astype(jnp.float32)
    x1 = _layernorm(x + attn, g1_ref[...], be1_ref[...])              # f32

    h = _gelu(jnp.dot(x1.astype(jnp.bfloat16), w1_ref[...],
                      preferred_element_type=jnp.float32) + b1_ref[...])
    ff = jnp.dot(h.astype(jnp.bfloat16), w2_ref[...],
                 preferred_element_type=jnp.float32) + b2_ref[...]
    # FFN dropout: identity (eval mode)

    y = _layernorm(x1 + ff, g2_ref[...], be2_ref[...])                # f32
    y_ref[0] = y.astype(y_ref.dtype)                                  # bf16 out
    # Fused sequence-mean pooling epilogue (used by the classifier after the
    # final layer; negligible cost on earlier layers).
    pooled_ref[0] = jnp.mean(y, axis=0, keepdims=True)                # (1, D) f32


def attn_out_ffn(ctx, x, p):
    B, S, D = x.shape

    def const_spec(arr):
        return pl.BlockSpec(arr.shape, lambda b, _n=arr.ndim: (0,) * _n)

    return pl.pallas_call(
        mlp_kernel,
        out_shape=(jax.ShapeDtypeStruct((B, S, D), jnp.bfloat16),
                   jax.ShapeDtypeStruct((B, 1, D), jnp.float32)),
        grid=(B,),
        in_specs=[pl.BlockSpec((1, S, D), lambda b: (b, 0, 0)),   # ctx
                  pl.BlockSpec((1, S, D), lambda b: (b, 0, 0)),   # residual x
                  const_spec(p["wo"]), const_spec(p["bo"]),
                  const_spec(p["g1"]), const_spec(p["be1"]),
                  const_spec(p["w1"]), const_spec(p["b1"]),
                  const_spec(p["w2"]), const_spec(p["b2"]),
                  const_spec(p["g2"]), const_spec(p["be2"])],
        out_specs=(pl.BlockSpec((1, S, D), lambda b: (b, 0, 0)),
                   pl.BlockSpec((1, 1, D), lambda b: (b, 0, 0))),
        compiler_params=pltpu.CompilerParams(
            dimension_semantics=("parallel",),
            vmem_limit_bytes=_VMEM_LIMIT),
    )(ctx, x, p["wo"], p["bo"], p["g1"], p["be1"],
      p["w1"], p["b1"], p["w2"], p["b2"], p["g2"], p["be2"])


# ----------------------------------------------------------------------------
# Kernel 3: classifier head on the already-pooled (B, D) features:
# Linear -> sigmoid.  (Mean pooling was fused into the final encoder layer.)
# ----------------------------------------------------------------------------
def classifier_kernel(pooled_ref, w_ref, b_ref, out_ref):
    logits = jnp.dot(pooled_ref[...].astype(jnp.bfloat16), w_ref[...],
                     preferred_element_type=jnp.float32) + b_ref[...]
    # dropout before fc: identity (eval mode)
    out_ref[...] = jax.nn.sigmoid(logits)          # F.sigmoid(self.fc(x))


def classifier(pooled, fc_w, fc_b):
    B, D = pooled.shape
    C = fc_w.shape[1]
    return pl.pallas_call(
        classifier_kernel,
        out_shape=jax.ShapeDtypeStruct((B, C), jnp.float32),
        grid=(1,),
        in_specs=[pl.BlockSpec((B, D), lambda i: (0, 0)),
                  pl.BlockSpec((D, C), lambda i: (0, 0)),
                  pl.BlockSpec((1, C), lambda i: (0, 0))],
        out_specs=pl.BlockSpec((B, C), lambda i: (0, 0)),
        compiler_params=pltpu.CompilerParams(
            dimension_semantics=("arbitrary",),
            vmem_limit_bytes=_VMEM_LIMIT),
    )(pooled, fc_w, fc_b)


# ----------------------------------------------------------------------------
# Full forward pass (embedding gather is JAX glue).
# ----------------------------------------------------------------------------
def bert_classifier_forward(token_ids, params, num_heads, num_layers):
    B, S = token_ids.shape
    x = jnp.take(params["tok_emb"], token_ids, axis=0)          # (B, S, D) f32
    x = x + params["pos_emb"][:S][None, :, :]
    # embedding dropout: identity (eval mode)
    x = x.astype(jnp.bfloat16)                                  # bf16 activations

    pooled = None
    for l in range(num_layers):
        p = params["layers"][l]
        ctx = attention(x, p["wq_h"], p["bq_h"], p["wk_h"], p["bk_h"],
                        p["wv_h"], p["bv_h"], num_heads)
        x, pooled = attn_out_ffn(ctx, x, p)

    pooled = pooled.reshape(B, -1)                              # (B, D) f32 mean over S
    return classifier(pooled, params["fc_w"], params["fc_b"])


# ----------------------------------------------------------------------------
# Deterministic parameter initialization (synthetic weights, no checkpoint).
# Matmul weights stored bf16 (q/k/v head-major); biases & LN params f32.
# ----------------------------------------------------------------------------
def init_params(key, vocab_size, embed_dim, max_len, num_layers, heads, num_classes):
    D = embed_dim
    Hd = 4 * D
    dh = D // heads

    def dense(k, din, dout):
        return (jax.random.normal(k, (din, dout), jnp.float32) * 0.02,
                jnp.zeros((1, dout), jnp.float32))

    def head_major(w, b):
        wh = w.reshape(D, heads, dh).transpose(1, 0, 2).astype(jnp.bfloat16)  # (H, D, dh)
        bh = b.reshape(1, heads, dh).transpose(1, 0, 2)                       # (H, 1, dh) f32
        return wh, bh

    keys = jax.random.split(key, 3 + num_layers)
    params = {
        "tok_emb": jax.random.normal(keys[0], (vocab_size, D), jnp.float32) * 0.02,
        "pos_emb": jax.random.normal(keys[1], (max_len, D), jnp.float32) * 0.02,
        "layers": [],
    }
    fc_w, fc_b = dense(keys[2], D, num_classes)
    params["fc_w"] = fc_w.astype(jnp.bfloat16)
    params["fc_b"] = fc_b

    for l in range(num_layers):
        lk = jax.random.split(keys[3 + l], 6)
        wq, bq = dense(lk[0], D, D)
        wk, bk = dense(lk[1], D, D)
        wv, bv = dense(lk[2], D, D)
        wo, bo = dense(lk[3], D, D)
        w1, b1 = dense(lk[4], D, Hd)
        w2, b2 = dense(lk[5], Hd, D)
        wq_h, bq_h = head_major(wq, bq)
        wk_h, bk_h = head_major(wk, bk)
        wv_h, bv_h = head_major(wv, bv)
        params["layers"].append({
            "wq_h": wq_h, "bq_h": bq_h,
            "wk_h": wk_h, "bk_h": bk_h,
            "wv_h": wv_h, "bv_h": bv_h,
            "wo": wo.astype(jnp.bfloat16), "bo": bo,
            "g1": jnp.ones((1, D), jnp.float32), "be1": jnp.zeros((1, D), jnp.float32),
            "w1": w1.astype(jnp.bfloat16), "b1": b1,
            "w2": w2.astype(jnp.bfloat16), "b2": b2,
            "g2": jnp.ones((1, D), jnp.float32), "be2": jnp.zeros((1, D), jnp.float32),
        })
    return params


if __name__ == "__main__":
    # Small, forward-consistent configuration.
    vocab_size, embed_dim, max_len = 100, 32, 16
    num_layers, heads, num_classes = 2, 4, 2
    # dropout = 0.1 in the PyTorch module; identity in eval/inference mode.
    B, S = 2, 8

    key = jax.random.PRNGKey(0)
    pkey, xkey = jax.random.split(key)
    params = init_params(pkey, vocab_size, embed_dim, max_len,
                         num_layers, heads, num_classes)
    token_ids = jax.random.randint(xkey, (B, S), 0, vocab_size, dtype=jnp.int32)

    out = bert_classifier_forward(token_ids, params, heads, num_layers)
    out = jax.block_until_ready(out)
    assert out.shape == (B, num_classes)
    assert bool(jnp.all((out >= 0.0) & (out <= 1.0)))
    print("KERNEL_OK")
</pallas_src>

<mosaic_0001>
module attributes {stable_mosaic.version = 11 : i64} {
  func.func @attention_kernel(%arg0: i32, %arg1: i32, %arg2: memref<1x8x32xbf16, #tpu.memory_space<vmem>>, %arg3: memref<1x32x8xbf16, #tpu.memory_space<vmem>>, %arg4: memref<1x1x8xf32, #tpu.memory_space<vmem>>, %arg5: memref<1x32x8xbf16, #tpu.memory_space<vmem>>, %arg6: memref<1x1x8xf32, #tpu.memory_space<vmem>>, %arg7: memref<1x32x8xbf16, #tpu.memory_space<vmem>>, %arg8: memref<1x1x8xf32, #tpu.memory_space<vmem>>, %arg9: memref<1x1x8x8xbf16, #tpu.memory_space<vmem>>) attributes {dimension_semantics = [#tpu.dimension_semantics<parallel>, #tpu.dimension_semantics<parallel>], iteration_bounds = array<i64: 2, 4>, scalar_prefetch = 0 : i64, scratch_operands = 0 : i64, tpu.core_type = #tpu.core_type<tc>, window_params = [{transform_indices = @transform_0, window_bounds = array<i64: 1, 8, 32>}, {transform_indices = @transform_1, window_bounds = array<i64: 1, 32, 8>}, {transform_indices = @transform_2, window_bounds = array<i64: 1, 1, 8>}, {transform_indices = @transform_3, window_bounds = array<i64: 1, 32, 8>}, {transform_indices = @transform_4, window_bounds = array<i64: 1, 1, 8>}, {transform_indices = @transform_5, window_bounds = array<i64: 1, 32, 8>}, {transform_indices = @transform_6, window_bounds = array<i64: 1, 1, 8>}, {transform_indices = @transform_7, window_bounds = array<i64: 1, 1, 8, 8>}]} {
    %c0 = arith.constant 0 : index
    %c0_0 = arith.constant 0 : index
    %c0_1 = arith.constant 0 : index
    %0 = vector.load %arg2[%c0, %c0_0, %c0_1] : memref<1x8x32xbf16, #tpu.memory_space<vmem>>, vector<1x8x32xbf16>
    %1 = vector.shape_cast %0 : vector<1x8x32xbf16> to vector<8x32xbf16>
    %c0_2 = arith.constant 0 : index
    %c0_3 = arith.constant 0 : index
    %c0_4 = arith.constant 0 : index
    %2 = vector.load %arg3[%c0_2, %c0_3, %c0_4] : memref<1x32x8xbf16, #tpu.memory_space<vmem>>, vector<1x32x8xbf16>
    %3 = vector.shape_cast %2 : vector<1x32x8xbf16> to vector<32x8xbf16>
    %cst = arith.constant dense<0.000000e+00> : vector<8x8xf32>
    %4 = tpu.matmul %1, %3, %cst {dimension_numbers = #tpu.dot_dimension_numbers<[1], [0], [0], [1], [0, 0, 1, 1], [], []>} : vector<8x32xbf16>, vector<32x8xbf16>, vector<8x8xf32> -> vector<8x8xf32>
    %c0_5 = arith.constant 0 : index
    %c0_6 = arith.constant 0 : index
    %c0_7 = arith.constant 0 : index
    %5 = vector.load %arg4[%c0_5, %c0_6, %c0_7] : memref<1x1x8xf32, #tpu.memory_space<vmem>>, vector<1x1x8xf32>
    %6 = vector.shape_cast %5 : vector<1x1x8xf32> to vector<1x8xf32>
    %7 = vector.broadcast %6 : vector<1x8xf32> to vector<8x8xf32>
    %8 = arith.addf %4, %7 : vector<8x8xf32>
    %c0_8 = arith.constant 0 : index
    %c0_9 = arith.constant 0 : index
    %c0_10 = arith.constant 0 : index
    %9 = vector.load %arg5[%c0_8, %c0_9, %c0_10] : memref<1x32x8xbf16, #tpu.memory_space<vmem>>, vector<1x32x8xbf16>
    %10 = vector.shape_cast %9 : vector<1x32x8xbf16> to vector<32x8xbf16>
    %cst_11 = arith.constant dense<0.000000e+00> : vector<8x8xf32>
    %11 = tpu.matmul %1, %10, %cst_11 {dimension_numbers = #tpu.dot_dimension_numbers<[1], [0], [0], [1], [0, 0, 1, 1], [], []>} : vector<8x32xbf16>, vector<32x8xbf16>, vector<8x8xf32> -> vector<8x8xf32>
    %c0_12 = arith.constant 0 : index
    %c0_13 = arith.constant 0 : index
    %c0_14 = arith.constant 0 : index
    %12 = vector.load %arg6[%c0_12, %c0_13, %c0_14] : memref<1x1x8xf32, #tpu.memory_space<vmem>>, vector<1x1x8xf32>
    %13 = vector.shape_cast %12 : vector<1x1x8xf32> to vector<1x8xf32>
    %14 = vector.broadcast %13 : vector<1x8xf32> to vector<8x8xf32>
    %15 = arith.addf %11, %14 : vector<8x8xf32>
    %c0_15 = arith.constant 0 : index
    %c0_16 = arith.constant 0 : index
    %c0_17 = arith.constant 0 : index
    %16 = vector.load %arg7[%c0_15, %c0_16, %c0_17] : memref<1x32x8xbf16, #tpu.memory_space<vmem>>, vector<1x32x8xbf16>
    %17 = vector.shape_cast %16 : vector<1x32x8xbf16> to vector<32x8xbf16>
    %cst_18 = arith.constant dense<0.000000e+00> : vector<8x8xf32>
    %18 = tpu.matmul %1, %17, %cst_18 {dimension_numbers = #tpu.dot_dimension_numbers<[1], [0], [0], [1], [0, 0, 1, 1], [], []>} : vector<8x32xbf16>, vector<32x8xbf16>, vector<8x8xf32> -> vector<8x8xf32>
    %c0_19 = arith.constant 0 : index
    %c0_20 = arith.constant 0 : index
    %c0_21 = arith.constant 0 : index
    %19 = vector.load %arg8[%c0_19, %c0_20, %c0_21] : memref<1x1x8xf32, #tpu.memory_space<vmem>>, vector<1x1x8xf32>
    %20 = vector.shape_cast %19 : vector<1x1x8xf32> to vector<1x8xf32>
    %21 = vector.broadcast %20 : vector<1x8xf32> to vector<8x8xf32>
    %22 = arith.addf %18, %21 : vector<8x8xf32>
    %23 = arith.truncf %8 : vector<8x8xf32> to vector<8x8xbf16>
    %24 = arith.truncf %15 : vector<8x8xf32> to vector<8x8xbf16>
    %25 = arith.truncf %22 : vector<8x8xf32> to vector<8x8xbf16>
    %26 = tpu.transpose %24, [1, 0] : vector<8x8xbf16> -> vector<8x8xbf16>
    %cst_22 = arith.constant dense<0.000000e+00> : vector<8x8xf32>
    %27 = tpu.matmul %23, %26, %cst_22 {dimension_numbers = #tpu.dot_dimension_numbers<[1], [0], [0], [1], [0, 0, 1, 1], [], []>} : vector<8x8xbf16>, vector<8x8xbf16>, vector<8x8xf32> -> vector<8x8xf32>
    %cst_23 = arith.constant 0.353553385 : f32
    %28 = vector.broadcast %cst_23 : f32 to vector<8x8xf32>
    %29 = arith.mulf %27, %28 : vector<8x8xf32>
    %cst_24 = arith.constant dense<0xFF800000> : vector<8xf32>
    %30 = vector.multi_reduction <maximumf>, %29, %cst_24 [1] : vector<8x8xf32> to vector<8xf32>
    %31 = vector.shape_cast %30 : vector<8xf32> to vector<8x1xf32>
    %32 = vector.broadcast %31 : vector<8x1xf32> to vector<8x8xf32>
    %33 = arith.subf %29, %32 : vector<8x8xf32>
    %34 = math.exp %33 : vector<8x8xf32>
    %cst_25 = arith.constant dense<0.000000e+00> : vector<8xf32>
    %35 = vector.multi_reduction <add>, %34, %cst_25 [1] : vector<8x8xf32> to vector<8xf32>
    %36 = vector.shape_cast %35 : vector<8xf32> to vector<8x1xf32>
    %37 = tpu.reciprocal %36 {approx = true} : vector<8x1xf32> -> vector<8x1xf32>
    %38 = vector.broadcast %37 : vector<8x1xf32> to vector<8x8xf32>
    %39 = arith.mulf %34, %38 : vector<8x8xf32>
    %40 = arith.truncf %39 : vector<8x8xf32> to vector<8x8xbf16>
    %cst_26 = arith.constant dense<0.000000e+00> : vector<8x8xf32>
    %41 = tpu.matmul %40, %25, %cst_26 {dimension_numbers = #tpu.dot_dimension_numbers<[1], [0], [0], [1], [0, 0, 1, 1], [], []>} : vector<8x8xbf16>, vector<8x8xbf16>, vector<8x8xf32> -> vector<8x8xf32>
    %42 = arith.truncf %41 : vector<8x8xf32> to vector<8x8xbf16>
    %c0_27 = arith.constant 0 : index
    %c0_28 = arith.constant 0 : index
    %c0_29 = arith.constant 0 : index
    %c0_30 = arith.constant 0 : index
    %43 = vector.load %arg9[%c0_27, %c0_28, %c0_29, %c0_30] : memref<1x1x8x8xbf16, #tpu.memory_space<vmem>>, vector<1x1x8x8xbf16>
    %44 = vector.shape_cast %43 : vector<1x1x8x8xbf16> to vector<8x8xbf16>
    %45 = vector.shape_cast %42 : vector<8x8xbf16> to vector<1x1x8x8xbf16>
    tpu.vector_store %arg9[%c0_27, %c0_28, %c0_29, %c0_30], %45 {strides = array<i32>} : memref<1x1x8x8xbf16, #tpu.memory_space<vmem>>, vector<1x1x8x8xbf16>,
    return
  }
  func.func @transform_0(%arg0: i32, %arg1: i32) -> (i32, i32, i32) {
    %c0_i32 = arith.constant 0 : i32
    %c0_i32_0 = arith.constant 0 : i32
    %c0_i32_1 = arith.constant 0 : i32
    return %arg0, %c0_i32, %c0_i32_0 : i32, i32, i32
  }
  func.func @transform_1(%arg0: i32, %arg1: i32) -> (i32, i32, i32) {
    %c0_i32 = arith.constant 0 : i32
    %c0_i32_0 = arith.constant 0 : i32
    %c0_i32_1 = arith.constant 0 : i32
    return %arg1, %c0_i32, %c0_i32_0 : i32, i32, i32
  }
  func.func @transform_2(%arg0: i32, %arg1: i32) -> (i32, i32, i32) {
    %c0_i32 = arith.constant 0 : i32
    %c0_i32_0 = arith.constant 0 : i32
    %c0_i32_1 = arith.constant 0 : i32
    return %arg1, %c0_i32, %c0_i32_0 : i32, i32, i32
  }
  func.func @transform_3(%arg0: i32, %arg1: i32) -> (i32, i32, i32) {
    %c0_i32 = arith.constant 0 : i32
    %c0_i32_0 = arith.constant 0 : i32
    %c0_i32_1 = arith.constant 0 : i32
    return %arg1, %c0_i32, %c0_i32_0 : i32, i32, i32
  }
  func.func @transform_4(%arg0: i32, %arg1: i32) -> (i32, i32, i32) {
    %c0_i32 = arith.constant 0 : i32
    %c0_i32_0 = arith.constant 0 : i32
    %c0_i32_1 = arith.constant 0 : i32
    return %arg1, %c0_i32, %c0_i32_0 : i32, i32, i32
  }
  func.func @transform_5(%arg0: i32, %arg1: i32) -> (i32, i32, i32) {
    %c0_i32 = arith.constant 0 : i32
    %c0_i32_0 = arith.constant 0 : i32
    %c0_i32_1 = arith.constant 0 : i32
    return %arg1, %c0_i32, %c0_i32_0 : i32, i32, i32
  }
  func.func @transform_6(%arg0: i32, %arg1: i32) -> (i32, i32, i32) {
    %c0_i32 = arith.constant 0 : i32
    %c0_i32_0 = arith.constant 0 : i32
    %c0_i32_1 = arith.constant 0 : i32
    return %arg1, %c0_i32, %c0_i32_0 : i32, i32, i32
  }
  func.func @transform_7(%arg0: i32, %arg1: i32) -> (i32, i32, i32, i32) {
    %c0_i32 = arith.constant 0 : i32
    %c0_i32_0 = arith.constant 0 : i32
    %c0_i32_1 = arith.constant 0 : i32
    return %arg0, %arg1, %c0_i32, %c0_i32_0 : i32, i32, i32, i32
  }
}

</mosaic_0001>

<llo_original>
// kernel: tpu_custom_call.1
$region0: #{tpu_custom_call.1}
  #allocation0 [shape = 'u32[]', space=smem, size = 0x4, offset = 0x4, fixed_abs, tag = 'smem constant byte address 0x4 - core index']
  #allocation1 [shape = 'u32[144,128]{1,0:T(1,128)}', space=vmem, size = 0x12000, scoped, tag = 'internal scratch']
  %s0 = inlined_call_operand.vmem [shape: bf16[2,8,32], index: 0, kind: input, shape index: {}]
  %s1 = inlined_call_operand.vmem [shape: bf16[4,32,8], index: 1, kind: input, shape index: {}]
  %s2 = inlined_call_operand.vmem [shape: f32[4,1,8], index: 2, kind: input, shape index: {}]
  %s3 = inlined_call_operand.vmem [shape: bf16[4,32,8], index: 3, kind: input, shape index: {}]
  %s4 = inlined_call_operand.vmem [shape: f32[4,1,8], index: 4, kind: input, shape index: {}]
  %s5 = inlined_call_operand.vmem [shape: bf16[4,32,8], index: 5, kind: input, shape index: {}]
  %s6 = inlined_call_operand.vmem [shape: f32[4,1,8], index: 6, kind: input, shape index: {}]
  %s7 = inlined_call_operand.hbm [shape: bf16[2,4,8,8], index: 7, kind: output, shape index: {}]
  %s8 = sld [smem:[#allocation0]]
  $region61: #{tpu_custom_call.1} parent=0
    _
  %s10 = ssub.s32 1, %s8
  %s11 = scalar_select 0, %s10, %s8
  $region1: #{tpu_custom_call.1} parent=0
    #allocation2 [shape = 'u8[4096]{0}', space=vmem, size = 0x1000, scoped, tag = 'output window, operand 0']
    #allocation3 [shape = 's32[2]{0}', space=sflag, size = 0x8, scoped, tag = 'scoped memory for tpu_custom_call.1']
    %12 = vsyncpa [#allocation3], 0
    %s13 = scalar_lea.sflag [#allocation3], 1
    %14 = vsyncpa %s13, 0
    loop: start=0, step=1, limit=10
    $region2: #{tpu_custom_call.1} parent=1 // loop_pre_header
      _
    $region3: #{tpu_custom_call.1} parent=1 // loop_header
      %s16 = sphi 0, %s20
      %p17 = scmp.ge.s32.totalorder %s16, 10
      %s23 = sphi 0, %s35
      %s24 = sphi 0, %s31
      %s25 = sphi 0, %s23
      %s26 = sphi 0, %s24
      %s27 = sphi 0, %s25
      %s28 = sphi 0, %s26
      %s38 = sphi 0, %s40
      %s41 = sphi 0, %s38
      %s42 = sphi 0, %s41
      %s58 = sphi 0, %s42
      %s64 = sphi 0, %s66
      %s67 = sphi 0, %s64
      %s68 = sphi 0, %s67
      %s84 = sphi 0, %s68
      %s90 = sphi 0, %s92
      %s93 = sphi 0, %s90
      %s94 = sphi 0, %s93
      %s110 = sphi 0, %s94
      %s116 = sphi 0, %s118
      %s119 = sphi 0, %s116
      %s120 = sphi 0, %s119
      %s136 = sphi 0, %s120
      %s142 = sphi 0, %s144
      %s145 = sphi 0, %s142
      %s146 = sphi 0, %s145
      %s162 = sphi 0, %s146
      %s168 = sphi 0, %s170
      %s171 = sphi 0, %s168
      %s172 = sphi 0, %s171
      %s188 = sphi 0, %s172
      %s194 = sphi 0, %s196
      %s197 = sphi 0, %s194
      %s198 = sphi 0, %s197
      %s214 = sphi 0, %s198
      %s222 = sphi 0, %s224
      %s225 = sphi 0, %s222
      %s226 = sphi 0, %s225
      %s242 = sphi 0, %s226
    $region4: #{tpu_custom_call.1} parent=1 // loop_header_branch
      %19 = sbr.rel (%p17) target = $region8
    $region5: #{tpu_custom_call.1} parent=1 // loop_body
      %s21 = ssub.s32 %s16, 1
      %s22 = ssub.s32 %s16, 2
      %s29 = sadd.s32 1, %s24
      %p30 = scmp.ge.s32.totalorder %s29, 4
      %s31 = scalar_select %p30, 0, %s29
      %s32 = sadd.s32 1, %s23
      %s33 = scalar_select %p30, %s32, %s23
      %p34 = scmp.ge.s32.totalorder %s33, 2
      %s35 = scalar_select %p34, 0, %s33
      %s36 = ssub.s32 %s23, %s35
      %p37 = scmp.eq.s32.totalorder %s36, 0
      %s39 = sadd.s32 %s38, 1
      %s40 = scalar_select %p37, %s38, %s39
      %p43 = pneg %p37
      %p44 = scmp.eq.s32.totalorder %s16, 7
      %p45 = por %p43, %p44
      %p46 = scmp.ne.s32.totalorder %s38, %s41
      %p47 = scmp.eq.s32.totalorder %s16, 0
      %p48 = por %p46, %p47
      %p49 = scmp.ne.s32.totalorder %s38, %s41
      %p50 = scmp.eq.s32.totalorder %s21, 7
      %p51 = por %p49, %p50
      %p52 = scmp.ne.s32.totalorder %s41, %s42
      %p53 = scmp.eq.s32.totalorder %s21, 0
      %p54 = por %p52, %p53
      %p55 = scmp.ne.s32.totalorder %s41, %s42
      %p56 = scmp.eq.s32.totalorder %s22, 7
      %p57 = por %p55, %p56
      %p59 = scmp.ne.s32.totalorder %s42, %s58
      %p60 = scmp.eq.s32.totalorder %s22, 0
      %p61 = por %p59, %p60
      %s62 = ssub.s32 %s24, %s31
      %p63 = scmp.eq.s32.totalorder %s62, 0
      %s65 = sadd.s32 %s64, 1
      %s66 = scalar_select %p63, %s64, %s65
      %p69 = pneg %p63
      %p70 = scmp.eq.s32.totalorder %s16, 7
      %p71 = por %p69, %p70
      %p72 = scmp.ne.s32.totalorder %s64, %s67
      %p73 = scmp.eq.s32.totalorder %s16, 0
      %p74 = por %p72, %p73
      %p75 = scmp.ne.s32.totalorder %s64, %s67
      %p76 = scmp.eq.s32.totalorder %s21, 7
      %p77 = por %p75, %p76
      %p78 = scmp.ne.s32.totalorder %s67, %s68
      %p79 = scmp.eq.s32.totalorder %s21, 0
      %p80 = por %p78, %p79
      %p81 = scmp.ne.s32.totalorder %s67, %s68
      %p82 = scmp.eq.s32.totalorder %s22, 7
      %p83 = por %p81, %p82
      %p85 = scmp.ne.s32.totalorder %s68, %s84
      %p86 = scmp.eq.s32.totalorder %s22, 0
      %p87 = por %p85, %p86
      %s88 = ssub.s32 %s24, %s31
      %p89 = scmp.eq.s32.totalorder %s88, 0
      %s91 = sadd.s32 %s90, 1
      %s92 = scalar_select %p89, %s90, %s91
      %p95 = pneg %p89
      %p96 = scmp.eq.s32.totalorder %s16, 7
      %p97 = por %p95, %p96
      %p98 = scmp.ne.s32.totalorder %s90, %s93
      %p99 = scmp.eq.s32.totalorder %s16, 0
      %p100 = por %p98, %p99
      %p101 = scmp.ne.s32.totalorder %s90, %s93
      %p102 = scmp.eq.s32.totalorder %s21, 7
      %p103 = por %p101, %p102
      %p104 = scmp.ne.s32.totalorder %s93, %s94
      %p105 = scmp.eq.s32.totalorder %s21, 0
      %p106 = por %p104, %p105
      %p107 = scmp.ne.s32.totalorder %s93, %s94
      %p108 = scmp.eq.s32.totalorder %s22, 7
      %p109 = por %p107, %p108
      %p111 = scmp.ne.s32.totalorder %s94, %s110
      %p112 = scmp.eq.s32.totalorder %s22, 0
      %p113 = por %p111, %p112
      %s114 = ssub.s32 %s24, %s31
      %p115 = scmp.eq.s32.totalorder %s114, 0
      %s117 = sadd.s32 %s116, 1
      %s118 = scalar_select %p115, %s116, %s117
      %p121 = pneg %p115
      %p122 = scmp.eq.s32.totalorder %s16, 7
      %p123 = por %p121, %p122
      %p124 = scmp.ne.s32.totalorder %s116, %s119
      %p125 = scmp.eq.s32.totalorder %s16, 0
      %p126 = por %p124, %p125
      %p127 = scmp.ne.s32.totalorder %s116, %s119
      %p128 = scmp.eq.s32.totalorder %s21, 7
      %p129 = por %p127, %p128
      %p130 = scmp.ne.s32.totalorder %s119, %s120
      %p131 = scmp.eq.s32.totalorder %s21, 0
      %p132 = por %p130, %p131
      %p133 = scmp.ne.s32.totalorder %s119, %s120
      %p134 = scmp.eq.s32.totalorder %s22, 7
      %p135 = por %p133, %p134
      %p137 = scmp.ne.s32.totalorder %s120, %s136
      %p138 = scmp.eq.s32.totalorder %s22, 0
      %p139 = por %p137, %p138
      %s140 = ssub.s32 %s24, %s31
      %p141 = scmp.eq.s32.totalorder %s140, 0
      %s143 = sadd.s32 %s142, 1
      %s144 = scalar_select %p141, %s142, %s143
      %p147 = pneg %p141
      %p148 = scmp.eq.s32.totalorder %s16, 7
      %p149 = por %p147, %p148
      %p150 = scmp.ne.s32.totalorder %s142, %s145
      %p151 = scmp.eq.s32.totalorder %s16, 0
      %p152 = por %p150, %p151
      %p153 = scmp.ne.s32.totalorder %s142, %s145
      %p154 = scmp.eq.s32.totalorder %s21, 7
      %p155 = por %p153, %p154
      %p156 = scmp.ne.s32.totalorder %s145, %s146
      %p157 = scmp.eq.s32.totalorder %s21, 0
      %p158 = por %p156, %p157
      %p159 = scmp.ne.s32.totalorder %s145, %s146
      %p160 = scmp.eq.s32.totalorder %s22, 7
      %p161 = por %p159, %p160
      %p163 = scmp.ne.s32.totalorder %s146, %s162
      %p164 = scmp.eq.s32.totalorder %s22, 0
      %p165 = por %p163, %p164
      %s166 = ssub.s32 %s24, %s31
      %p167 = scmp.eq.s32.totalorder %s166, 0
      %s169 = sadd.s32 %s168, 1
      %s170 = scalar_select %p167, %s168, %s169
      %p173 = pneg %p167
      %p174 = scmp.eq.s32.totalorder %s16, 7
      %p175 = por %p173, %p174
      %p176 = scmp.ne.s32.totalorder %s168, %s171
      %p177 = scmp.eq.s32.totalorder %s16, 0
      %p178 = por %p176, %p177
      %p179 = scmp.ne.s32.totalorder %s168, %s171
      %p180 = scmp.eq.s32.totalorder %s21, 7
      %p181 = por %p179, %p180
      %p182 = scmp.ne.s32.totalorder %s171, %s172
      %p183 = scmp.eq.s32.totalorder %s21, 0
      %p184 = por %p182, %p183
      %p185 = scmp.ne.s32.totalorder %s171, %s172
      %p186 = scmp.eq.s32.totalorder %s22, 7
      %p187 = por %p185, %p186
      %p189 = scmp.ne.s32.totalorder %s172, %s188
      %p190 = scmp.eq.s32.totalorder %s22, 0
      %p191 = por %p189, %p190
      %s192 = ssub.s32 %s24, %s31
      %p193 = scmp.eq.s32.totalorder %s192, 0
      %s195 = sadd.s32 %s194, 1
      %s196 = scalar_select %p193, %s194, %s195
      %p199 = pneg %p193
      %p200 = scmp.eq.s32.totalorder %s16, 7
      %p201 = por %p199, %p200
      %p202 = scmp.ne.s32.totalorder %s194, %s197
      %p203 = scmp.eq.s32.totalorder %s16, 0
      %p204 = por %p202, %p203
      %p205 = scmp.ne.s32.totalorder %s194, %s197
      %p206 = scmp.eq.s32.totalorder %s21, 7
      %p207 = por %p205, %p206
      %p208 = scmp.ne.s32.totalorder %s197, %s198
      %p209 = scmp.eq.s32.totalorder %s21, 0
      %p210 = por %p208, %p209
      %p211 = scmp.ne.s32.totalorder %s197, %s198
      %p212 = scmp.eq.s32.totalorder %s22, 7
      %p213 = por %p211, %p212
      %p215 = scmp.ne.s32.totalorder %s198, %s214
      %p216 = scmp.eq.s32.totalorder %s22, 0
      %p217 = por %p215, %p216
      %s218 = ssub.s32 %s23, %s35
      %s219 = ssub.s32 %s24, %s31
      %s220 = sor.u32 %s218, %s219
      %p221 = scmp.eq.s32.totalorder %s220, 0
      %s223 = sadd.s32 %s222, 1
      %s224 = scalar_select %p221, %s222, %s223
      %p227 = pneg %p221
      %p228 = scmp.eq.s32.totalorder %s16, 7
      %p229 = por %p227, %p228
      %p230 = scmp.ne.s32.totalorder %s222, %s225
      %p231 = scmp.eq.s32.totalorder %s16, 0
      %p232 = por %p230, %p231
      %p233 = scmp.ne.s32.totalorder %s222, %s225
      %p234 = scmp.eq.s32.totalorder %s21, 7
      %p235 = por %p233, %p234
      %p236 = scmp.ne.s32.totalorder %s225, %s226
      %p237 = scmp.eq.s32.totalorder %s21, 0
      %p238 = por %p236, %p237
      %p239 = scmp.ne.s32.totalorder %s225, %s226
      %p240 = scmp.eq.s32.totalorder %s22, 7
      %p241 = por %p239, %p240
      %p243 = scmp.ne.s32.totalorder %s226, %s242
      %p244 = scmp.eq.s32.totalorder %s22, 0
      %p245 = por %p243, %p244
      %p246 = scmp.le.s32.totalorder 1, %s16
      %p247 = scmp.lt.s32.totalorder %s16, 9
      %p248 = pnand %p246, %p247
      %p249 = pneg %p248
      // Predicated region
      $region9: #{tpu_custom_call.1} parent=5 // pred_check
        _
      $region10: #{tpu_custom_call.1} parent=5 // pred_check_branch
        %251 = sbr.rel (%p248) target = $region12
      $region11: #{tpu_custom_call.1} parent=5 // pred_region
        %s252 = ssub.s32 %s16, 1
      $region12: #{tpu_custom_call.1} parent=5 // pred_fallthru
        _
      %p253 = scmp.lt.s32.totalorder %s16, 8
      // Predicated region
      $region13: #{tpu_custom_call.1} parent=5 // pred_check
        %p254 = pneg %p253
      $region14: #{tpu_custom_call.1} parent=5 // pred_check_branch
        %256 = sbr.rel (%p254) target = $region16
      $region15: #{tpu_custom_call.1} parent=5 // pred_region
        // Predicated region
        $region17: #{tpu_custom_call.1} parent=15 // pred_check
          %p257 = pneg %p48
        $region18: #{tpu_custom_call.1} parent=15 // pred_check_branch
          %259 = sbr.rel (%p257) target = $region20
        $region19: #{tpu_custom_call.1} parent=15 // pred_region
          %p260 = scmp.lt.s32.totalorder %s23, 1
          %s261 = scalar_select %p260, %s23, 1
          %s262 = smul.addr %s261, 4
          %s263 = scalar_lea.vmem %s0, %s262
        $region20: #{tpu_custom_call.1} parent=15 // pred_fallthru
          _
        // Predicated region
        $region21: #{tpu_custom_call.1} parent=15 // pred_check
          %p264 = pneg %p74
        $region22: #{tpu_custom_call.1} parent=15 // pred_check_branch
          %266 = sbr.rel (%p264) target = $region24
        $region23: #{tpu_custom_call.1} parent=15 // pred_region
          %p267 = scmp.lt.s32.totalorder %s24, 3
          %s268 = scalar_select %p267, %s24, 3
          %s269 = smul.addr %s268, 4
          %s270 = smul.addr %s269, 4
          %s271 = scalar_lea.vmem %s1, %s270
        $region24: #{tpu_custom_call.1} parent=15 // pred_fallthru
          _
        // Predicated region
        $region25: #{tpu_custom_call.1} parent=15 // pred_check
          %p272 = pneg %p100
        $region26: #{tpu_custom_call.1} parent=15 // pred_check_branch
          %274 = sbr.rel (%p272) target = $region28
        $region27: #{tpu_custom_call.1} parent=15 // pred_region
          %p275 = scmp.lt.s32.totalorder %s24, 3
          %s276 = scalar_select %p275, %s24, 3
          %s277 = scalar_lea.vmem %s2, %s276
        $region28: #{tpu_custom_call.1} parent=15 // pred_fallthru
          _
        // Predicated region
        $region29: #{tpu_custom_call.1} parent=15 // pred_check
          %p278 = pneg %p126
        $region30: #{tpu_custom_call.1} parent=15 // pred_check_branch
          %280 = sbr.rel (%p278) target = $region32
        $region31: #{tpu_custom_call.1} parent=15 // pred_region
          %p281 = scmp.lt.s32.totalorder %s24, 3
          %s282 = scalar_select %p281, %s24, 3
          %s283 = smul.addr %s282, 4
          %s284 = smul.addr %s283, 4
          %s285 = scalar_lea.vmem %s3, %s284
        $region32: #{tpu_custom_call.1} parent=15 // pred_fallthru
          _
        // Predicated region
        $region33: #{tpu_custom_call.1} parent=15 // pred_check
          %p286 = pneg %p152
        $region34: #{tpu_custom_call.1} parent=15 // pred_check_branch
          %288 = sbr.rel (%p286) target = $region36
        $region35: #{tpu_custom_call.1} parent=15 // pred_region
          %p289 = scmp.lt.s32.totalorder %s24, 3
          %s290 = scalar_select %p289, %s24, 3
          %s291 = scalar_lea.vmem %s4, %s290
        $region36: #{tpu_custom_call.1} parent=15 // pred_fallthru
          _
        // Predicated region
        $region37: #{tpu_custom_call.1} parent=15 // pred_check
          %p292 = pneg %p178
        $region38: #{tpu_custom_call.1} parent=15 // pred_check_branch
          %294 = sbr.rel (%p292) target = $region40
        $region39: #{tpu_custom_call.1} parent=15 // pred_region
          %p295 = scmp.lt.s32.totalorder %s24, 3
          %s296 = scalar_select %p295, %s24, 3
          %s297 = smul.addr %s296, 4
          %s298 = smul.addr %s297, 4
          %s299 = scalar_lea.vmem %s5, %s298
        $region40: #{tpu_custom_call.1} parent=15 // pred_fallthru
          _
        // Predicated region
        $region41: #{tpu_custom_call.1} parent=15 // pred_check
          %p300 = pneg %p204
        $region42: #{tpu_custom_call.1} parent=15 // pred_check_branch
          %302 = sbr.rel (%p300) target = $region44
        $region43: #{tpu_custom_call.1} parent=15 // pred_region
          %p303 = scmp.lt.s32.totalorder %s24, 3
          %s304 = scalar_select %p303, %s24, 3
          %s305 = scalar_lea.vmem %s6, %s304
        $region44: #{tpu_custom_call.1} parent=15 // pred_fallthru
          _
      $region16: #{tpu_custom_call.1} parent=5 // pred_fallthru
        _
      %p306 = scmp.le.s32.totalorder 1, %s16
      %p307 = scmp.lt.s32.totalorder %s16, 9
      %p308 = pnand %p306, %p307
      %p309 = pneg %p308
      // Predicated region
      $region45: #{tpu_custom_call.1} parent=5 // pred_check
        _
      $region46: #{tpu_custom_call.1} parent=5 // pred_check_branch
        %311 = sbr.rel (%p308) target = $region48
      $region47: #{tpu_custom_call.1} parent=5 // pred_region
        %s312 = ssub.s32 %s16, 1
        %p313 = scmp.lt.s32.totalorder %s25, 1
        %s314 = scalar_select %p313, %s25, 1
        %s315 = smul.addr %s314, 4
        %s316 = scalar_lea.vmem %s0, %s315
        %p317 = pneg %p54
        %p318 = pneg %p51
        %p319 = scmp.lt.s32.totalorder %s26, 3
        %s320 = scalar_select %p319, %s26, 3
        %s321 = smul.addr %s320, 4
        %s322 = smul.addr %s321, 4
        %s323 = scalar_lea.vmem %s1, %s322
        %p324 = pneg %p80
        %p325 = pneg %p77
        %p326 = scmp.lt.s32.totalorder %s26, 3
        %s327 = scalar_select %p326, %s26, 3
        %s328 = scalar_lea.vmem %s2, %s327
        %p329 = pneg %p106
        %p330 = pneg %p103
        %p331 = scmp.lt.s32.totalorder %s26, 3
        %s332 = scalar_select %p331, %s26, 3
        %s333 = smul.addr %s332, 4
        %s334 = smul.addr %s333, 4
        %s335 = scalar_lea.vmem %s3, %s334
        %p336 = pneg %p132
        %p337 = pneg %p129
        %p338 = scmp.lt.s32.totalorder %s26, 3
        %s339 = scalar_select %p338, %s26, 3
        %s340 = scalar_lea.vmem %s4, %s339
        %p341 = pneg %p158
        %p342 = pneg %p155
        %p343 = scmp.lt.s32.totalorder %s26, 3
        %s344 = scalar_select %p343, %s26, 3
        %s345 = smul.addr %s344, 4
        %s346 = smul.addr %s345, 4
        %s347 = scalar_lea.vmem %s5, %s346
        %p348 = pneg %p184
        %p349 = pneg %p181
        %p350 = scmp.lt.s32.totalorder %s26, 3
        %s351 = scalar_select %p350, %s26, 3
        %s352 = scalar_lea.vmem %s6, %s351
        %p353 = pneg %p210
        %p354 = pneg %p207
        %p355 = pneg %p238
        %p356 = pneg %p235
        %s357 = sand.u32 %s225, 1
        %s358 = scalar_lea.sflag [#allocation3], %s357
        %s359 = sand.u32 %s225, 1
        %s360 = smul.addr %s359, 4
        %s361 = scalar_lea.vmem [#allocation2], %s360
        %p362 = scmp.lt.s32.totalorder %s25, 1
        %s363 = scalar_select %p362, %s25, 1
        %s364 = smul.addr %s363, 4
        %s365 = scalar_lea.vmem %s0, %s364
        %p366 = scmp.lt.s32.totalorder %s26, 3
        %s367 = scalar_select %p366, %s26, 3
        %s368 = smul.addr %s367, 4
        %s369 = smul.addr %s368, 4
        %s370 = scalar_lea.vmem %s1, %s369
        %p371 = scmp.lt.s32.totalorder %s26, 3
        %s372 = scalar_select %p371, %s26, 3
        %s373 = scalar_lea.vmem %s2, %s372
        %p374 = scmp.lt.s32.totalorder %s26, 3
        %s375 = scalar_select %p374, %s26, 3
        %s376 = smul.addr %s375, 4
        %s377 = smul.addr %s376, 4
        %s378 = scalar_lea.vmem %s3, %s377
        %p379 = scmp.lt.s32.totalorder %s26, 3
        %s380 = scalar_select %p379, %s26, 3
        %s381 = scalar_lea.vmem %s4, %s380
        %p382 = scmp.lt.s32.totalorder %s26, 3
        %s383 = scalar_select %p382, %s26, 3
        %s384 = smul.addr %s383, 4
        %s385 = smul.addr %s384, 4
        %s386 = scalar_lea.vmem %s5, %s385
        %p387 = scmp.lt.s32.totalorder %s26, 3
        %s388 = scalar_select %p387, %s26, 3
        %s389 = scalar_lea.vmem %s6, %s388
        %v391 = vld [vmem:[%s365] sm:$0xf]
        %v392 = vld [vmem:[%s370] sm:$0xf]
        %v393 = vld [vmem:[%s370 + $0x4] sm:$0xf]
        %v394 = vld [vmem:[%s370 + $0x8] sm:$0xf]
        %v395 = vld [vmem:[%s370 + $0xc] sm:$0xf]
        %v396 = vld [vmem:[%s373] sm:$0x1]
        %v398 = vlaneseq
        %v399 = vshrl.u32 %v398, 7
        %v400 = vsub.s32 0, %v399
        %v401 = vrot.slane %v396, %v400
        %v407 = vunpack.c.l.b16 %v392
        %v408 = vunpack.c.l.b16 %v393
        %v409 = vunpack.c.l.b16 %v394
        %v410 = vunpack.c.l.b16 %v395
        %v411 = vpack.c.b16 %v408, %v407
        %v412 = vpack.c.b16 %v410, %v409
        %vm415 = vcmask 261120
        %v417 = vsel %vm415, %v391, 0
        %419 = vmatprep.subr.bf16.mxu0 0
        %420 = vmatpush1.bf16.msra.mxu0 0
        %421 = vmatprep.subr.bf16.mxu0 0
        %422 = vmatpush1.bf16.msra.mxu0 0
        %423 = vmatprep.subr.bf16.mxu0 0
        %424 = vmatpush1.bf16.msra.mxu0 0
        %425 = vmatprep.subr.bf16.mxu0 0
        %426 = vmatpush1.bf16.msra.mxu0 0
        %427 = vmatprep.subr.bf16.mxu0 0
        %428 = vmatpush1.bf16.msra.mxu0 0
        %429 = vmatprep.subr.bf16.mxu0 0
        %430 = vmatpush1.bf16.msra.mxu0 0
        %431 = vmatprep.subr.bf16.mxu0 0
        %432 = vmatpush1.bf16.msra.mxu0 %v412
        %433 = vmatprep.subr.bf16.mxu0 0
        %434 = vmatpush1.bf16.msra.mxu0 %v411
        %435 = vmatprep.subr.bf16.mxu0 0
        %436 = vmatpush2.bf16.msra.mxu0 0
        %437 = vmatprep.subr.bf16.mxu0 0
        %438 = vmatpush2.bf16.msra.mxu0 0
        %439 = vmatprep.subr.bf16.mxu0 0
        %440 = vmatpush2.bf16.msra.mxu0 0
        %441 = vmatprep.subr.bf16.mxu0 0
        %442 = vmatpush2.bf16.msra.mxu0 0
        %443 = vmatprep.subr.bf16.mxu0 0
        %444 = vmatpush2.bf16.msra.mxu0 0
        %445 = vmatprep.subr.bf16.mxu0 0
        %446 = vmatpush2.bf16.msra.mxu0 0
        %447 = vmatprep.subr.bf16.mxu0 0
        %448 = vmatpush2.bf16.msra.mxu0 0
        %449 = vmatprep.subr.bf16.mxu0 0
        %450 = vmatpush2.bf16.msra.mxu0 0
        %451 = vmatprep.mubr.bf16.mxu0 0
        %452 = vmatmul.mubr.bf16.gmra.mxu0 %v417
        %v453 = vpop.f32.mrf.mxu0
        %v454 = vadd.f32 %v401, %v453
        %v455 = vpop.f32.mrf.mxu0
        %v456 = vpop.f32.mrf.mxu0
        %v457 = vpop.f32.mrf.mxu0
        %458 = vdwg.mxu0
        %v459 = vld [vmem:[%s378] sm:$0xf]
        %v460 = vld [vmem:[%s378 + $0x4] sm:$0xf]
        %v461 = vld [vmem:[%s378 + $0x8] sm:$0xf]
        %v462 = vld [vmem:[%s378 + $0xc] sm:$0xf]
        %v463 = vld [vmem:[%s381] sm:$0x1]
        %v465 = vlaneseq
        %v466 = vshrl.u32 %v465, 7
        %v467 = vsub.s32 0, %v466
        %v468 = vrot.slane %v463, %v467
        %v474 = vunpack.c.l.b16 %v459
        %v475 = vunpack.c.l.b16 %v460
        %v476 = vunpack.c.l.b16 %v461
        %v477 = vunpack.c.l.b16 %v462
        %v478 = vpack.c.b16 %v475, %v474
        %v479 = vpack.c.b16 %v477, %v476
        %482 = vmatprep.subr.bf16.mxu0 0
        %483 = vmatpush1.bf16.msra.mxu0 0
        %484 = vmatprep.subr.bf16.mxu0 0
        %485 = vmatpush1.bf16.msra.mxu0 0
        %486 = vmatprep.subr.bf16.mxu0 0
        %487 = vmatpush1.bf16.msra.mxu0 0
        %488 = vmatprep.subr.bf16.mxu0 0
        %489 = vmatpush1.bf16.msra.mxu0 0
        %490 = vmatprep.subr.bf16.mxu0 0
        %491 = vmatpush1.bf16.msra.mxu0 0
        %492 = vmatprep.subr.bf16.mxu0 0
        %493 = vmatpush1.bf16.msra.mxu0 0
        %494 = vmatprep.subr.bf16.mxu0 0
        %495 = vmatpush1.bf16.msra.mxu0 %v479
        %496 = vmatprep.subr.bf16.mxu0 0
        %497 = vmatpush1.bf16.msra.mxu0 %v478
        %498 = vmatprep.subr.bf16.mxu0 0
        %499 = vmatpush2.bf16.msra.mxu0 0
        %500 = vmatprep.subr.bf16.mxu0 0
        %501 = vmatpush2.bf16.msra.mxu0 0
        %502 = vmatprep.subr.bf16.mxu0 0
        %503 = vmatpush2.bf16.msra.mxu0 0
        %504 = vmatprep.subr.bf16.mxu0 0
        %505 = vmatpush2.bf16.msra.mxu0 0
        %506 = vmatprep.subr.bf16.mxu0 0
        %507 = vmatpush2.bf16.msra.mxu0 0
        %508 = vmatprep.subr.bf16.mxu0 0
        %509 = vmatpush2.bf16.msra.mxu0 0
        %510 = vmatprep.subr.bf16.mxu0 0
        %511 = vmatpush2.bf16.msra.mxu0 0
        %512 = vmatprep.subr.bf16.mxu0 0
        %513 = vmatpush2.bf16.msra.mxu0 0
        %514 = vmatprep.mubr.bf16.mxu0 0
        %515 = vmatmul.mubr.bf16.gmra.mxu0 %v417
        %v516 = vpop.f32.mrf.mxu0
        %v517 = vadd.f32 %v468, %v516
        %v518 = vpop.f32.mrf.mxu0
        %v519 = vpop.f32.mrf.mxu0
        %v520 = vpop.f32.mrf.mxu0
        %521 = vdwg.mxu0
        %v522 = vld [vmem:[%s386] sm:$0xf]
        %v523 = vld [vmem:[%s386 + $0x4] sm:$0xf]
        %v524 = vld [vmem:[%s386 + $0x8] sm:$0xf]
        %v525 = vld [vmem:[%s386 + $0xc] sm:$0xf]
        %v526 = vld [vmem:[%s389] sm:$0x1]
        %v528 = vlaneseq
        %v529 = vshrl.u32 %v528, 7
        %v530 = vsub.s32 0, %v529
        %v531 = vrot.slane %v526, %v530
        %v537 = vunpack.c.l.b16 %v522
        %v538 = vunpack.c.l.b16 %v523
        %v539 = vunpack.c.l.b16 %v524
        %v540 = vunpack.c.l.b16 %v525
        %v541 = vpack.c.b16 %v538, %v537
        %v542 = vpack.c.b16 %v540, %v539
        %545 = vmatprep.subr.bf16.mxu0 0
        %546 = vmatpush1.bf16.msra.mxu0 0
        %547 = vmatprep.subr.bf16.mxu0 0
        %548 = vmatpush1.bf16.msra.mxu0 0
        %549 = vmatprep.subr.bf16.mxu0 0
        %550 = vmatpush1.bf16.msra.mxu0 0
        %551 = vmatprep.subr.bf16.mxu0 0
        %552 = vmatpush1.bf16.msra.mxu0 0
        %553 = vmatprep.subr.bf16.mxu0 0
        %554 = vmatpush1.bf16.msra.mxu0 0
        %555 = vmatprep.subr.bf16.mxu0 0
        %556 = vmatpush1.bf16.msra.mxu0 0
        %557 = vmatprep.subr.bf16.mxu0 0
        %558 = vmatpush1.bf16.msra.mxu0 %v542
        %559 = vmatprep.subr.bf16.mxu0 0
        %560 = vmatpush1.bf16.msra.mxu0 %v541
        %561 = vmatprep.subr.bf16.mxu0 0
        %562 = vmatpush2.bf16.msra.mxu0 0
        %563 = vmatprep.subr.bf16.mxu0 0
        %564 = vmatpush2.bf16.msra.mxu0 0
        %565 = vmatprep.subr.bf16.mxu0 0
        %566 = vmatpush2.bf16.msra.mxu0 0
        %567 = vmatprep.subr.bf16.mxu0 0
        %568 = vmatpush2.bf16.msra.mxu0 0
        %569 = vmatprep.subr.bf16.mxu0 0
        %570 = vmatpush2.bf16.msra.mxu0 0
        %571 = vmatprep.subr.bf16.mxu0 0
        %572 = vmatpush2.bf16.msra.mxu0 0
        %573 = vmatprep.subr.bf16.mxu0 0
        %574 = vmatpush2.bf16.msra.mxu0 0
        %575 = vmatprep.subr.bf16.mxu0 0
        %576 = vmatpush2.bf16.msra.mxu0 0
        %577 = vmatprep.mubr.bf16.mxu0 0
        %578 = vmatmul.mubr.bf16.gmra.mxu0 %v417
        %v579 = vpop.f32.mrf.mxu0
        %v580 = vadd.f32 %v531, %v579
        %v581 = vpop.f32.mrf.mxu0
        %v582 = vpop.f32.mrf.mxu0
        %v583 = vpop.f32.mrf.mxu0
        %584 = vdwg.mxu0
        %v585 = vpack.c.bf16 %v454, %v454
        %v586 = vpack.c.bf16 %v517, %v517
        %v587 = vpack.c.bf16 %v580, %v580
        %vm588 = vcmask 64512
        %v590 = vsel %vm588, %v585, 0
        %v593 = vsel %vm588, %v586, 0
        %595 = vmatprep.subr.bf16.mxu0 0
        %596 = vmatpush1.bf16.xpose.msra.mxu0 0
        %597 = vmatprep.subr.bf16.mxu0 0
        %598 = vmatpush1.bf16.xpose.msra.mxu0 0
        %599 = vmatprep.subr.bf16.mxu0 0
        %600 = vmatpush1.bf16.xpose.msra.mxu0 0
        %601 = vmatprep.subr.bf16.mxu0 0
        %602 = vmatpush1.bf16.xpose.msra.mxu0 0
        %603 = vmatprep.subr.bf16.mxu0 0
        %604 = vmatpush1.bf16.xpose.msra.mxu0 0
        %605 = vmatprep.subr.bf16.mxu0 0
        %606 = vmatpush1.bf16.xpose.msra.mxu0 0
        %607 = vmatprep.subr.bf16.mxu0 0
        %608 = vmatpush1.bf16.xpose.msra.mxu0 0
        %609 = vmatprep.subr.bf16.mxu0 0
        %610 = vmatpush1.bf16.xpose.msra.mxu0 %v593
        %611 = vmatprep.subr.bf16.mxu0 0
        %612 = vmatpush2.bf16.xpose.msra.mxu0 0
        %613 = vmatprep.subr.bf16.mxu0 0
        %614 = vmatpush2.bf16.xpose.msra.mxu0 0
        %615 = vmatprep.subr.bf16.mxu0 0
        %616 = vmatpush2.bf16.xpose.msra.mxu0 0
        %617 = vmatprep.subr.bf16.mxu0 0
        %618 = vmatpush2.bf16.xpose.msra.mxu0 0
        %619 = vmatprep.subr.bf16.mxu0 0
        %620 = vmatpush2.bf16.xpose.msra.mxu0 0
        %621 = vmatprep.subr.bf16.mxu0 0
        %622 = vmatpush2.bf16.xpose.msra.mxu0 0
        %623 = vmatprep.subr.bf16.mxu0 0
        %624 = vmatpush2.bf16.xpose.msra.mxu0 0
        %625 = vmatprep.subr.bf16.mxu0 0
        %626 = vmatpush2.bf16.xpose.msra.mxu0 0
        %627 = vmatprep.mubr.bf16.mxu0 0
        %628 = vmatmul.mubr.bf16.gmra.mxu0 %v590
        %v629 = vpop.f32.mrf.mxu0
        %v630 = vadd.f32 0.0, %v629
        %v631 = vpop.f32.mrf.mxu0
        %v632 = vpop.f32.mrf.mxu0
        %v633 = vpop.f32.mrf.mxu0
        %634 = vdwg.mxu0
        %v635 = vmul.f32 %v630, 0.35355338
        %v636 = vsel %vm588, %v635, -inf
        %637 = vmax.xlane.f32.xlu0 %v636
        %v638 = vpop.xlane.xlu0 %637
        %v639 = vsub.f32 %v635, %v638
        %v640 = vmul.f32 %v639, 1.442695
        %v641 = vpow.pop %v640
        %v642 = vsel %vm588, %v641, 0.0
        %643 = vadd.xlane.f32.xlu0 %v642
        %v644 = vpop.xlane.xlu0 %643
        %v645 = vrcp.pop %v644
        %v646 = vmul.f32 %v641, %v645
        %v647 = vpack.c.bf16 %v646, %v646
        %v649 = vsel %vm588, %v647, 0
        %vm651 = vcmask 1043456
        %v653 = vsel %vm651, %v587, 0
        %655 = vmatprep.subr.bf16.mxu0 0
        %656 = vmatpush1.bf16.msra.mxu0 0
        %657 = vmatprep.subr.bf16.mxu0 0
        %658 = vmatpush1.bf16.msra.mxu0 0
        %659 = vmatprep.subr.bf16.mxu0 0
        %660 = vmatpush1.bf16.msra.mxu0 0
        %661 = vmatprep.subr.bf16.mxu0 0
        %662 = vmatpush1.bf16.msra.mxu0 0
        %663 = vmatprep.subr.bf16.mxu0 0
        %664 = vmatpush1.bf16.msra.mxu0 0
        %665 = vmatprep.subr.bf16.mxu0 0
        %666 = vmatpush1.bf16.msra.mxu0 0
        %667 = vmatprep.subr.bf16.mxu0 0
        %668 = vmatpush1.bf16.msra.mxu0 0
        %669 = vmatprep.subr.bf16.mxu0 0
        %670 = vmatpush1.bf16.msra.mxu0 %v653
        %671 = vmatprep.subr.bf16.mxu0 0
        %672 = vmatpush2.bf16.msra.mxu0 0
        %673 = vmatprep.subr.bf16.mxu0 0
        %674 = vmatpush2.bf16.msra.mxu0 0
        %675 = vmatprep.subr.bf16.mxu0 0
        %676 = vmatpush2.bf16.msra.mxu0 0
        %677 = vmatprep.subr.bf16.mxu0 0
        %678 = vmatpush2.bf16.msra.mxu0 0
        %679 = vmatprep.subr.bf16.mxu0 0
        %680 = vmatpush2.bf16.msra.mxu0 0
        %681 = vmatprep.subr.bf16.mxu0 0
        %682 = vmatpush2.bf16.msra.mxu0 0
        %683 = vmatprep.subr.bf16.mxu0 0
        %684 = vmatpush2.bf16.msra.mxu0 0
        %685 = vmatprep.subr.bf16.mxu0 0
        %686 = vmatpush2.bf16.msra.mxu0 0
        %687 = vmatprep.mubr.bf16.mxu0 0
        %688 = vmatmul.mubr.bf16.gmra.mxu0 %v649
        %v689 = vpop.f32.mrf.mxu0
        %v690 = vadd.f32 0.0, %v689
        %v691 = vpop.f32.mrf.mxu0
        %v692 = vpop.f32.mrf.mxu0
        %v693 = vpop.f32.mrf.mxu0
        %694 = vdwg.mxu0
        %v695 = vpack.c.bf16 %v690, %v690
        %vm696 = vcmask 60416
        %697 = vst.msk [vmem:[%s361] sm:$0xf] %vm696, %v695
        %s698 = sand.u32 %s225, 1
        %s699 = scalar_lea.sflag [#allocation3], %s698
        %s700 = sand.u32 %s225, 1
        %s701 = smul.addr %s700, 4
        %s702 = scalar_lea.vmem [#allocation2], %s701
        // Predicated region
        $region49: #{tpu_custom_call.1} parent=47 // pred_check
          %p703 = pneg %p235
        $region50: #{tpu_custom_call.1} parent=47 // pred_check_branch
          %705 = sbr.rel (%p703) target = $region52
        $region51: #{tpu_custom_call.1} parent=47 // pred_region
          %s707 = ssub.s32 64, 64
          %708 = vsyncadd %s699, %s707
          %s709 = smul.addr %s25, 4
          %s710 = sadd.s32 %s26, %s709
          %s711 = smul.addr %s710, 64
          %s712 = scalar_lea.hbm %s7, %s711
          %s714 = sshll.u32 %s702, 4
          %s715 = int_to_ptr.vmem [resolvable:$true] %s714
          %717 = dma.vmem_to_hbm [thread:$0]  %s715, 64, %s712, %s699
        $region52: #{tpu_custom_call.1} parent=47 // pred_fallthru
          _
      $region48: #{tpu_custom_call.1} parent=5 // pred_fallthru
        _
      %p718 = scmp.le.s32.totalorder 2, %s16
      // Predicated region
      $region53: #{tpu_custom_call.1} parent=5 // pred_check
        %p719 = pneg %p718
      $region54: #{tpu_custom_call.1} parent=5 // pred_check_branch
        %721 = sbr.rel (%p719) target = $region56
      $region55: #{tpu_custom_call.1} parent=5 // pred_region
        %s722 = ssub.s32 %s16, 2
        // Predicated region
        $region57: #{tpu_custom_call.1} parent=55 // pred_check
          %p723 = pneg %p241
        $region58: #{tpu_custom_call.1} parent=55 // pred_check_branch
          %725 = sbr.rel (%p723) target = $region60
        $region59: #{tpu_custom_call.1} parent=55 // pred_region
          %s726 = sand.u32 %s226, 1
          %s727 = scalar_lea.sflag [#allocation3], %s726
          %s728 = sand.u32 %s226, 1
          %s729 = smul.addr %s728, 4
          %s730 = scalar_lea.vmem [#allocation2], %s729
          %731 = dma.done %s727, 64
        $region60: #{tpu_custom_call.1} parent=55 // pred_fallthru
          _
      $region56: #{tpu_custom_call.1} parent=5 // pred_fallthru
        _
    $region6: #{tpu_custom_call.1} parent=1 // loop_footer
      %s20 = sadd.s32 1, %s16
    $region7: #{tpu_custom_call.1} parent=1 // loop_footer_branch
      %15 = sbr.rel target = $region3
    $region8: #{tpu_custom_call.1} parent=1 // loop_exit
      _
    %732 = vsyncpa [#allocation3], 1
    %s733 = scalar_lea.sflag [#allocation3], 1
    %734 = vsyncpa %s733, 1

</llo_original>
